<compile_context>
chip_gen: v5e
topology: v5e:2x2
jax: 0.10.0
libtpu: 0.0.40
codegen_flags: <defaults>
</compile_context>

<pallas_src>
import functools

import jax
import jax.numpy as jnp
from jax import lax
from jax.experimental import pallas as pl
from jax.experimental.pallas import tpu as pltpu


# --------------------------- Kernel 1: fused QKV projection ---------------------------

def _qkv_proj_kernel(x_ref, w_ref, q_ref, k_ref, v_ref, *, num_heads, head_dim):
    C = num_heads * head_dim
    xb = x_ref[0]                    # (tn, C)
    w = w_ref[...]                   # (C, 3C), scale pre-folded into q columns
    # Single wide MXU matmul for q|k|v of all heads; f32 accumulate, cast once.
    y = jnp.dot(xb, w, preferred_element_type=jnp.float32)   # (tn, 3C)
    y = y.astype(q_ref.dtype)
    for h in range(num_heads):       # static unroll: cheap lane slices + stores
        c = h * head_dim
        q_ref[0, h] = y[:, c:c + head_dim]
        k_ref[0, h] = y[:, C + c:C + c + head_dim]
        v_ref[0, h] = y[:, 2 * C + c:2 * C + c + head_dim]


# ---------------- Kernel 2: flash attention + fused output projection -----------------

def _flash_attn_proj_kernel(q_ref, k_ref, v_ref, wp_ref, b_ref, out_ref,
                            m_ref, l_ref, acc_ref, oacc_ref):
    h = pl.program_id(2)
    kv = pl.program_id(3)
    num_heads = pl.num_programs(2)
    num_kv = pl.num_programs(3)

    @pl.when(kv == 0)
    def _():
        m_ref[...] = jnp.full(m_ref.shape, -jnp.inf, jnp.float32)
        l_ref[...] = jnp.zeros(l_ref.shape, jnp.float32)
        acc_ref[...] = jnp.zeros(acc_ref.shape, jnp.float32)

    q = q_ref[0, 0]                  # (tq, Dh)  (scale folded into weights)
    k = k_ref[0, 0]                  # (tkv, Dh)
    v = v_ref[0, 0]                  # (tkv, Dh)

    # Scores: contract head_dim of q with head_dim of k directly (no K transpose).
    s = lax.dot_general(q, k, (((1,), (1,)), ((), ())),
                        preferred_element_type=jnp.float32)   # (tq, tkv) f32

    # Online softmax (all softmax math in f32; normalization deferred).
    m_prev = m_ref[...]
    m_new = jnp.maximum(m_prev, jnp.max(s, axis=-1, keepdims=True))
    alpha = jnp.exp(m_prev - m_new)
    p = jnp.exp(s - m_new)                                    # (tq, tkv) f32
    l_ref[...] = alpha * l_ref[...] + jnp.sum(p, axis=-1, keepdims=True)
    acc_ref[...] = alpha * acc_ref[...] + jnp.dot(
        p.astype(v.dtype), v, preferred_element_type=jnp.float32)
    m_ref[...] = m_new

    @pl.when(kv == num_kv - 1)
    def _():
        # Deferred normalization: one (tq, Dh) multiply + EUP approx reciprocal.
        o = acc_ref[...] * pl.reciprocal(l_ref[...], approx=True)   # (tq, Dh) f32
        wp = wp_ref[h]                                               # (Dh, C), resident
        contrib = jnp.dot(o.astype(wp.dtype), wp,
                          preferred_element_type=jnp.float32)        # (tq, C) f32

        @pl.when(h == 0)
        def _():
            oacc_ref[...] = contrib + b_ref[...].astype(jnp.float32)

        @pl.when(h > 0)
        def _():
            oacc_ref[...] = oacc_ref[...] + contrib

        @pl.when(h == num_heads - 1)
        def _():
            out_ref[0] = oacc_ref[...].astype(out_ref.dtype)


# ------------------------------------- Wrapper ----------------------------------------

def _pick_tile(n, target):
    """Largest divisor of n that is <= target and a multiple of 8 (else n itself)."""
    if n <= target:
        return n
    for t in range(min(target, n), 0, -1):
        if n % t == 0 and t % 8 == 0:
            return t
    return n


def seq_parallel_attention(x, w_qkv, w_proj, b_proj, num_heads, *,
                           seq_tile_q=256, seq_tile_kv=512, seq_tile_proj=256):
    """x: (B, N, C); w_qkv: (3C, C); w_proj: (C, C); b_proj: (C,)."""
    B, N, C = x.shape
    H = num_heads
    Dh = C // H
    scale = Dh ** -0.5
    dtype = x.dtype

    # One-time wrapper-side weight prep.  nn.Linear computes x @ W^T.
    w_fused = jnp.transpose(w_qkv)                                    # (C, 3C)
    w_fused = jnp.concatenate([w_fused[:, :C] * scale, w_fused[:, C:]],
                              axis=1).astype(dtype)                   # scale folded into q
    wpt = jnp.transpose(w_proj).reshape(H, Dh, C).astype(dtype)       # per-head proj
    bp = b_proj.reshape(1, C).astype(jnp.float32)

    tn = _pick_tile(N, seq_tile_proj)
    tq = _pick_tile(N, seq_tile_q)
    tkv = _pick_tile(N, seq_tile_kv)

    # ---- Kernel 1: fused QKV projection -> q, k, v in (B, H, N, Dh) ----
    qkv_kernel = functools.partial(_qkv_proj_kernel, num_heads=H, head_dim=Dh)
    head_shape = jax.ShapeDtypeStruct((B, H, N, Dh), dtype)
    q, k, v = pl.pallas_call(
        qkv_kernel,
        out_shape=(head_shape, head_shape, head_shape),
        grid_spec=pltpu.PrefetchScalarGridSpec(
            num_scalar_prefetch=0,
            grid=(B, N // tn),
            in_specs=[
                pl.BlockSpec((1, tn, C), lambda b, i: (b, i, 0)),      # x tile
                pl.BlockSpec((C, 3 * C), lambda b, i: (0, 0)),         # resident fused W
            ],
            out_specs=[
                pl.BlockSpec((1, H, tn, Dh), lambda b, i: (b, 0, i, 0)),
                pl.BlockSpec((1, H, tn, Dh), lambda b, i: (b, 0, i, 0)),
                pl.BlockSpec((1, H, tn, Dh), lambda b, i: (b, 0, i, 0)),
            ],
        ),
        compiler_params=pltpu.CompilerParams(
            dimension_semantics=("parallel", "parallel"),
            vmem_limit_bytes=64 * 1024 * 1024),
    )(x, w_fused)

    # ---- Kernel 2: flash attention + fused output projection ----
    out = pl.pallas_call(
        _flash_attn_proj_kernel,
        out_shape=jax.ShapeDtypeStruct((B, N, C), dtype),
        grid_spec=pltpu.PrefetchScalarGridSpec(
            num_scalar_prefetch=0,
            grid=(B, N // tq, H, N // tkv),          # reduction axes (H, kv) last
            in_specs=[
                pl.BlockSpec((1, 1, tq, Dh), lambda b, qi, h, ki: (b, h, qi, 0)),   # q
                pl.BlockSpec((1, 1, tkv, Dh), lambda b, qi, h, ki: (b, h, ki, 0)),  # k
                pl.BlockSpec((1, 1, tkv, Dh), lambda b, qi, h, ki: (b, h, ki, 0)),  # v
                pl.BlockSpec((H, Dh, C), lambda b, qi, h, ki: (0, 0, 0)),  # resident proj
                pl.BlockSpec((1, C), lambda b, qi, h, ki: (0, 0)),         # resident bias
            ],
            out_specs=pl.BlockSpec((1, tq, C), lambda b, qi, h, ki: (b, qi, 0)),
            scratch_shapes=[
                pltpu.VMEM((tq, 1), jnp.float32),    # running max m
                pltpu.VMEM((tq, 1), jnp.float32),    # running denominator l
                pltpu.VMEM((tq, Dh), jnp.float32),   # attention accumulator
                pltpu.VMEM((tq, C), jnp.float32),    # f32 output accumulator over heads
            ]),
        compiler_params=pltpu.CompilerParams(
            dimension_semantics=("parallel", "parallel", "arbitrary", "arbitrary"),
            vmem_limit_bytes=64 * 1024 * 1024),
    )(q, k, v, wpt, bp)
    return out


# ------------------------------------ Reference ----------------------------------------

def _reference(x, w_qkv, w_proj, b_proj, num_heads):
    """Plain-JAX replica of SeqParallelAttention.forward (sp_size=1, no flash)."""
    B, N, C = x.shape
    H = num_heads
    Dh = C // H
    qkv = x @ w_qkv.T
    qkv = qkv.reshape(B, N, 3, H, Dh).transpose(2, 0, 3, 1, 4)
    q, k, v = qkv[0], qkv[1], qkv[2]                 # (B, H, N, Dh)
    q = q * (Dh ** -0.5)
    attn = jnp.einsum('bhnd,bhmd->bhnm', q, k)
    attn = jax.nn.softmax(attn.astype(jnp.float32), axis=-1).astype(x.dtype)
    o = jnp.einsum('bhnm,bhmd->bhnd', attn, v)
    o = o.transpose(0, 2, 1, 3).reshape(B, N, C)
    return o @ w_proj.T + b_proj


if __name__ == "__main__":
    B, N, C, H = 2, 16, 32, 4

    key = jax.random.PRNGKey(0)
    kx, kqkv, kproj, kb = jax.random.split(key, 4)

    x = jax.random.normal(kx, (B, N, C), dtype=jnp.float32)
    # Deterministic synthetic parameters (shapes from nn.Linear in __init__).
    w_qkv = jax.random.normal(kqkv, (3 * C, C), dtype=jnp.float32) * 0.05
    w_proj = jax.random.normal(kproj, (C, C), dtype=jnp.float32) * 0.05
    b_proj = jax.random.normal(kb, (C,), dtype=jnp.float32) * 0.05

    out = seq_parallel_attention(x, w_qkv, w_proj, b_proj, H)
    out = jax.block_until_ready(out)

    ref = _reference(x, w_qkv, w_proj, b_proj, H)
    assert out.shape == (B, N, C)
    assert jnp.allclose(out, ref, atol=1e-3, rtol=1e-3), (
        f"max abs err {jnp.max(jnp.abs(out - ref))}")

    print("KERNEL_OK")
</pallas_src>

<mosaic_0001>
module attributes {stable_mosaic.version = 11 : i64} {
  func.func @_qkv_proj_kernel(%arg0: i32, %arg1: i32, %arg2: memref<1x16x32xf32, #tpu.memory_space<vmem>>, %arg3: memref<32x96xf32, #tpu.memory_space<vmem>>, %arg4: memref<1x4x16x8xf32, #tpu.memory_space<vmem>>, %arg5: memref<1x4x16x8xf32, #tpu.memory_space<vmem>>, %arg6: memref<1x4x16x8xf32, #tpu.memory_space<vmem>>) attributes {dimension_semantics = [#tpu.dimension_semantics<parallel>, #tpu.dimension_semantics<parallel>], iteration_bounds = array<i64: 2, 1>, scalar_prefetch = 0 : i64, scratch_operands = 0 : i64, tpu.core_type = #tpu.core_type<tc>, window_params = [{transform_indices = @transform_0, window_bounds = array<i64: 1, 16, 32>}, {pipeline_mode = #tpu.pipeline_mode<synchronous>, transform_indices = @transform_1, window_bounds = array<i64: 32, 96>}, {transform_indices = @transform_2, window_bounds = array<i64: 1, 4, 16, 8>}, {transform_indices = @transform_3, window_bounds = array<i64: 1, 4, 16, 8>}, {transform_indices = @transform_4, window_bounds = array<i64: 1, 4, 16, 8>}]} {
    %c0 = arith.constant 0 : index
    %c0_0 = arith.constant 0 : index
    %c0_1 = arith.constant 0 : index
    %0 = vector.load %arg2[%c0, %c0_0, %c0_1] : memref<1x16x32xf32, #tpu.memory_space<vmem>>, vector<1x16x32xf32>
    %1 = vector.shape_cast %0 : vector<1x16x32xf32> to vector<16x32xf32>
    %c0_2 = arith.constant 0 : index
    %c0_3 = arith.constant 0 : index
    %2 = vector.load %arg3[%c0_2, %c0_3] : memref<32x96xf32, #tpu.memory_space<vmem>>, vector<32x96xf32>
    %cst = arith.constant dense<0.000000e+00> : vector<16x96xf32>
    %3 = tpu.matmul %1, %2, %cst {dimension_numbers = #tpu.dot_dimension_numbers<[1], [0], [0], [1], [0, 0, 1, 1], [], []>} : vector<16x32xf32>, vector<32x96xf32>, vector<16x96xf32> -> vector<16x96xf32>
    %4 = vector.extract_strided_slice %3 {offsets = [0, 0], sizes = [16, 8], strides = [1, 1]} : vector<16x96xf32> to vector<16x8xf32>
    %c0_4 = arith.constant 0 : index
    %c0_5 = arith.constant 0 : index
    %c0_6 = arith.constant 0 : index
    %c0_7 = arith.constant 0 : index
    %5 = vector.load %arg4[%c0_4, %c0_5, %c0_6, %c0_7] : memref<1x4x16x8xf32, #tpu.memory_space<vmem>>, vector<1x1x16x8xf32>
    %6 = vector.shape_cast %5 : vector<1x1x16x8xf32> to vector<16x8xf32>
    %7 = vector.shape_cast %4 : vector<16x8xf32> to vector<1x1x16x8xf32>
    tpu.vector_store %arg4[%c0_4, %c0_5, %c0_6, %c0_7], %7 {strides = array<i32>} : memref<1x4x16x8xf32, #tpu.memory_space<vmem>>, vector<1x1x16x8xf32>,
    %8 = vector.extract_strided_slice %3 {offsets = [0, 32], sizes = [16, 8], strides = [1, 1]} : vector<16x96xf32> to vector<16x8xf32>
    %c0_8 = arith.constant 0 : index
    %c0_9 = arith.constant 0 : index
    %c0_10 = arith.constant 0 : index
    %c0_11 = arith.constant 0 : index
    %9 = vector.load %arg5[%c0_8, %c0_9, %c0_10, %c0_11] : memref<1x4x16x8xf32, #tpu.memory_space<vmem>>, vector<1x1x16x8xf32>
    %10 = vector.shape_cast %9 : vector<1x1x16x8xf32> to vector<16x8xf32>
    %11 = vector.shape_cast %8 : vector<16x8xf32> to vector<1x1x16x8xf32>
    tpu.vector_store %arg5[%c0_8, %c0_9, %c0_10, %c0_11], %11 {strides = array<i32>} : memref<1x4x16x8xf32, #tpu.memory_space<vmem>>, vector<1x1x16x8xf32>,
    %12 = vector.extract_strided_slice %3 {offsets = [0, 64], sizes = [16, 8], strides = [1, 1]} : vector<16x96xf32> to vector<16x8xf32>
    %c0_12 = arith.constant 0 : index
    %c0_13 = arith.constant 0 : index
    %c0_14 = arith.constant 0 : index
    %c0_15 = arith.constant 0 : index
    %13 = vector.load %arg6[%c0_12, %c0_13, %c0_14, %c0_15] : memref<1x4x16x8xf32, #tpu.memory_space<vmem>>, vector<1x1x16x8xf32>
    %14 = vector.shape_cast %13 : vector<1x1x16x8xf32> to vector<16x8xf32>
    %15 = vector.shape_cast %12 : vector<16x8xf32> to vector<1x1x16x8xf32>
    tpu.vector_store %arg6[%c0_12, %c0_13, %c0_14, %c0_15], %15 {strides = array<i32>} : memref<1x4x16x8xf32, #tpu.memory_space<vmem>>, vector<1x1x16x8xf32>,
    %16 = vector.extract_strided_slice %3 {offsets = [0, 8], sizes = [16, 8], strides = [1, 1]} : vector<16x96xf32> to vector<16x8xf32>
    %c0_16 = arith.constant 0 : index
    %c1 = arith.constant 1 : index
    %c0_17 = arith.constant 0 : index
    %c0_18 = arith.constant 0 : index
    %17 = vector.load %arg4[%c0_16, %c1, %c0_17, %c0_18] : memref<1x4x16x8xf32, #tpu.memory_space<vmem>>, vector<1x1x16x8xf32>
    %18 = vector.shape_cast %17 : vector<1x1x16x8xf32> to vector<16x8xf32>
    %19 = vector.shape_cast %16 : vector<16x8xf32> to vector<1x1x16x8xf32>
    tpu.vector_store %arg4[%c0_16, %c1, %c0_17, %c0_18], %19 {strides = array<i32>} : memref<1x4x16x8xf32, #tpu.memory_space<vmem>>, vector<1x1x16x8xf32>,
    %20 = vector.extract_strided_slice %3 {offsets = [0, 40], sizes = [16, 8], strides = [1, 1]} : vector<16x96xf32> to vector<16x8xf32>
    %c0_19 = arith.constant 0 : index
    %c1_20 = arith.constant 1 : index
    %c0_21 = arith.constant 0 : index
    %c0_22 = arith.constant 0 : index
    %21 = vector.load %arg5[%c0_19, %c1_20, %c0_21, %c0_22] : memref<1x4x16x8xf32, #tpu.memory_space<vmem>>, vector<1x1x16x8xf32>
    %22 = vector.shape_cast %21 : vector<1x1x16x8xf32> to vector<16x8xf32>
    %23 = vector.shape_cast %20 : vector<16x8xf32> to vector<1x1x16x8xf32>
    tpu.vector_store %arg5[%c0_19, %c1_20, %c0_21, %c0_22], %23 {strides = array<i32>} : memref<1x4x16x8xf32, #tpu.memory_space<vmem>>, vector<1x1x16x8xf32>,
    %24 = vector.extract_strided_slice %3 {offsets = [0, 72], sizes = [16, 8], strides = [1, 1]} : vector<16x96xf32> to vector<16x8xf32>
    %c0_23 = arith.constant 0 : index
    %c1_24 = arith.constant 1 : index
    %c0_25 = arith.constant 0 : index
    %c0_26 = arith.constant 0 : index
    %25 = vector.load %arg6[%c0_23, %c1_24, %c0_25, %c0_26] : memref<1x4x16x8xf32, #tpu.memory_space<vmem>>, vector<1x1x16x8xf32>
    %26 = vector.shape_cast %25 : vector<1x1x16x8xf32> to vector<16x8xf32>
    %27 = vector.shape_cast %24 : vector<16x8xf32> to vector<1x1x16x8xf32>
    tpu.vector_store %arg6[%c0_23, %c1_24, %c0_25, %c0_26], %27 {strides = array<i32>} : memref<1x4x16x8xf32, #tpu.memory_space<vmem>>, vector<1x1x16x8xf32>,
    %28 = vector.extract_strided_slice %3 {offsets = [0, 16], sizes = [16, 8], strides = [1, 1]} : vector<16x96xf32> to vector<16x8xf32>
    %c0_27 = arith.constant 0 : index
    %c2 = arith.constant 2 : index
    %c0_28 = arith.constant 0 : index
    %c0_29 = arith.constant 0 : index
    %29 = vector.load %arg4[%c0_27, %c2, %c0_28, %c0_29] : memref<1x4x16x8xf32, #tpu.memory_space<vmem>>, vector<1x1x16x8xf32>
    %30 = vector.shape_cast %29 : vector<1x1x16x8xf32> to vector<16x8xf32>
    %31 = vector.shape_cast %28 : vector<16x8xf32> to vector<1x1x16x8xf32>
    tpu.vector_store %arg4[%c0_27, %c2, %c0_28, %c0_29], %31 {strides = array<i32>} : memref<1x4x16x8xf32, #tpu.memory_space<vmem>>, vector<1x1x16x8xf32>,
    %32 = vector.extract_strided_slice %3 {offsets = [0, 48], sizes = [16, 8], strides = [1, 1]} : vector<16x96xf32> to vector<16x8xf32>
    %c0_30 = arith.constant 0 : index
    %c2_31 = arith.constant 2 : index
    %c0_32 = arith.constant 0 : index
    %c0_33 = arith.constant 0 : index
    %33 = vector.load %arg5[%c0_30, %c2_31, %c0_32, %c0_33] : memref<1x4x16x8xf32, #tpu.memory_space<vmem>>, vector<1x1x16x8xf32>
    %34 = vector.shape_cast %33 : vector<1x1x16x8xf32> to vector<16x8xf32>
    %35 = vector.shape_cast %32 : vector<16x8xf32> to vector<1x1x16x8xf32>
    tpu.vector_store %arg5[%c0_30, %c2_31, %c0_32, %c0_33], %35 {strides = array<i32>} : memref<1x4x16x8xf32, #tpu.memory_space<vmem>>, vector<1x1x16x8xf32>,
    %36 = vector.extract_strided_slice %3 {offsets = [0, 80], sizes = [16, 8], strides = [1, 1]} : vector<16x96xf32> to vector<16x8xf32>
    %c0_34 = arith.constant 0 : index
    %c2_35 = arith.constant 2 : index
    %c0_36 = arith.constant 0 : index
    %c0_37 = arith.constant 0 : index
    %37 = vector.load %arg6[%c0_34, %c2_35, %c0_36, %c0_37] : memref<1x4x16x8xf32, #tpu.memory_space<vmem>>, vector<1x1x16x8xf32>
    %38 = vector.shape_cast %37 : vector<1x1x16x8xf32> to vector<16x8xf32>
    %39 = vector.shape_cast %36 : vector<16x8xf32> to vector<1x1x16x8xf32>
    tpu.vector_store %arg6[%c0_34, %c2_35, %c0_36, %c0_37], %39 {strides = array<i32>} : memref<1x4x16x8xf32, #tpu.memory_space<vmem>>, vector<1x1x16x8xf32>,
    %40 = vector.extract_strided_slice %3 {offsets = [0, 24], sizes = [16, 8], strides = [1, 1]} : vector<16x96xf32> to vector<16x8xf32>
    %c0_38 = arith.constant 0 : index
    %c3 = arith.constant 3 : index
    %c0_39 = arith.constant 0 : index
    %c0_40 = arith.constant 0 : index
    %41 = vector.load %arg4[%c0_38, %c3, %c0_39, %c0_40] : memref<1x4x16x8xf32, #tpu.memory_space<vmem>>, vector<1x1x16x8xf32>
    %42 = vector.shape_cast %41 : vector<1x1x16x8xf32> to vector<16x8xf32>
    %43 = vector.shape_cast %40 : vector<16x8xf32> to vector<1x1x16x8xf32>
    tpu.vector_store %arg4[%c0_38, %c3, %c0_39, %c0_40], %43 {strides = array<i32>} : memref<1x4x16x8xf32, #tpu.memory_space<vmem>>, vector<1x1x16x8xf32>,
    %44 = vector.extract_strided_slice %3 {offsets = [0, 56], sizes = [16, 8], strides = [1, 1]} : vector<16x96xf32> to vector<16x8xf32>
    %c0_41 = arith.constant 0 : index
    %c3_42 = arith.constant 3 : index
    %c0_43 = arith.constant 0 : index
    %c0_44 = arith.constant 0 : index
    %45 = vector.load %arg5[%c0_41, %c3_42, %c0_43, %c0_44] : memref<1x4x16x8xf32, #tpu.memory_space<vmem>>, vector<1x1x16x8xf32>
    %46 = vector.shape_cast %45 : vector<1x1x16x8xf32> to vector<16x8xf32>
    %47 = vector.shape_cast %44 : vector<16x8xf32> to vector<1x1x16x8xf32>
    tpu.vector_store %arg5[%c0_41, %c3_42, %c0_43, %c0_44], %47 {strides = array<i32>} : memref<1x4x16x8xf32, #tpu.memory_space<vmem>>, vector<1x1x16x8xf32>,
    %48 = vector.extract_strided_slice %3 {offsets = [0, 88], sizes = [16, 8], strides = [1, 1]} : vector<16x96xf32> to vector<16x8xf32>
    %c0_45 = arith.constant 0 : index
    %c3_46 = arith.constant 3 : index
    %c0_47 = arith.constant 0 : index
    %c0_48 = arith.constant 0 : index
    %49 = vector.load %arg6[%c0_45, %c3_46, %c0_47, %c0_48] : memref<1x4x16x8xf32, #tpu.memory_space<vmem>>, vector<1x1x16x8xf32>
    %50 = vector.shape_cast %49 : vector<1x1x16x8xf32> to vector<16x8xf32>
    %51 = vector.shape_cast %48 : vector<16x8xf32> to vector<1x1x16x8xf32>
    tpu.vector_store %arg6[%c0_45, %c3_46, %c0_47, %c0_48], %51 {strides = array<i32>} : memref<1x4x16x8xf32, #tpu.memory_space<vmem>>, vector<1x1x16x8xf32>,
    return
  }
  func.func @transform_0(%arg0: i32, %arg1: i32) -> (i32, i32, i32) {
    %c0_i32 = arith.constant 0 : i32
    %c0_i32_0 = arith.constant 0 : i32
    return %arg0, %arg1, %c0_i32 : i32, i32, i32
  }
  func.func @transform_1(%arg0: i32, %arg1: i32) -> (i32, i32) {
    %c0_i32 = arith.constant 0 : i32
    %c0_i32_0 = arith.constant 0 : i32
    %c0_i32_1 = arith.constant 0 : i32
    return %c0_i32, %c0_i32_0 : i32, i32
  }
  func.func @transform_2(%arg0: i32, %arg1: i32) -> (i32, i32, i32, i32) {
    %c0_i32 = arith.constant 0 : i32
    %c0_i32_0 = arith.constant 0 : i32
    %c0_i32_1 = arith.constant 0 : i32
    return %arg0, %c0_i32, %arg1, %c0_i32_0 : i32, i32, i32, i32
  }
  func.func @transform_3(%arg0: i32, %arg1: i32) -> (i32, i32, i32, i32) {
    %c0_i32 = arith.constant 0 : i32
    %c0_i32_0 = arith.constant 0 : i32
    %c0_i32_1 = arith.constant 0 : i32
    return %arg0, %c0_i32, %arg1, %c0_i32_0 : i32, i32, i32, i32
  }
  func.func @transform_4(%arg0: i32, %arg1: i32) -> (i32, i32, i32, i32) {
    %c0_i32 = arith.constant 0 : i32
    %c0_i32_0 = arith.constant 0 : i32
    %c0_i32_1 = arith.constant 0 : i32
    return %arg0, %c0_i32, %arg1, %c0_i32_0 : i32, i32, i32, i32
  }
}

</mosaic_0001>

<llo_original>
// kernel: tpu_custom_call.1
$region0: #{tpu_custom_call.1}
  #allocation0 [shape = 'u32[]', space=smem, size = 0x4, offset = 0x4, fixed_abs, tag = 'smem constant byte address 0x4 - core index']
  #allocation1 [shape = 'u32[72,128]{1,0:T(1,128)}', space=vmem, size = 0x9000, scoped, tag = 'internal scratch']
  %s0 = inlined_call_operand.hbm [shape: f32[2,16,32], index: 0, kind: input, shape index: {}]
  %s1 = inlined_call_operand.hbm [shape: f32[32,96], index: 1, kind: input, shape index: {}]
  %s2 = inlined_call_operand.vmem [shape: f32[2,4,16,8], index: 2, kind: output, shape index: {0}]
  %s3 = inlined_call_operand.vmem [shape: f32[2,4,16,8], index: 3, kind: output, shape index: {1}]
  %s4 = inlined_call_operand.vmem [shape: f32[2,4,16,8], index: 4, kind: output, shape index: {2}]
  %5 = xla_tuple %s2, %s3, %s4
  %s6 = sld [smem:[#allocation0]]
  $region65: #{tpu_custom_call.1} parent=0
    _
  %s8 = ssub.s32 1, %s6
  %s9 = scalar_select 0, %s8, %s6
  $region1: #{tpu_custom_call.1} parent=0
    #allocation2 [shape = 'u8[16384]{0}', space=vmem, size = 0x4000, scoped, tag = 'input window, operand 0']
    #allocation3 [shape = 's32[2]{0}', space=sflag, size = 0x8, scoped, tag = 'scoped memory for tpu_custom_call.1']
    #allocation4 [shape = 'u8[16384]{0}', space=vmem, size = 0x4000, scoped, tag = 'input window, operand 1, single buffered']
    #allocation5 [shape = 's32[1]{0}', space=sflag, size = 0x4, scoped, tag = 'scoped memory for tpu_custom_call.1']
    %10 = vsyncpa [#allocation3], 0
    %s11 = scalar_lea.sflag [#allocation3], 1
    %12 = vsyncpa %s11, 0
    %13 = vsyncpa [#allocation5], 0
    loop: start=0, step=1, limit=4
    $region2: #{tpu_custom_call.1} parent=1 // loop_pre_header
      _
    $region3: #{tpu_custom_call.1} parent=1 // loop_header
      %s15 = sphi 0, %s19
      %p16 = scmp.ge.s32.totalorder %s15, 4
      %s22 = sphi 0, %s34
      %s23 = sphi 0, %s30
      %s24 = sphi 0, %s22
      %s25 = sphi 0, %s23
      %s26 = sphi 0, %s24
      %s27 = sphi 0, %s25
      %s39 = sphi 0, %s41
      %s42 = sphi 0, %s39
      %s43 = sphi 0, %s42
      %s59 = sphi 0, %s43
      %s63 = sphi 0, %s63
      %s65 = sphi 0, %s63
      %s66 = sphi 0, %s65
      %s80 = sphi 0, %s66
      %s88 = sphi 0, %s90
      %s91 = sphi 0, %s88
      %s92 = sphi 0, %s91
      %s108 = sphi 0, %s92
      %s116 = sphi 0, %s118
      %s119 = sphi 0, %s116
      %s120 = sphi 0, %s119
      %s136 = sphi 0, %s120
      %s144 = sphi 0, %s146
      %s147 = sphi 0, %s144
      %s148 = sphi 0, %s147
      %s164 = sphi 0, %s148
    $region4: #{tpu_custom_call.1} parent=1 // loop_header_branch
      %18 = sbr.rel (%p16) target = $region8
    $region5: #{tpu_custom_call.1} parent=1 // loop_body
      %s20 = ssub.s32 %s15, 1
      %s21 = ssub.s32 %s15, 2
      %s28 = sadd.s32 1, %s23
      %p29 = scmp.ge.s32.totalorder %s28, 1
      %s30 = scalar_select %p29, 0, %s28
      %s31 = sadd.s32 1, %s22
      %s32 = scalar_select %p29, %s31, %s22
      %p33 = scmp.ge.s32.totalorder %s32, 2
      %s34 = scalar_select %p33, 0, %s32
      %s35 = ssub.s32 %s22, %s34
      %s36 = ssub.s32 %s23, %s30
      %s37 = sor.u32 %s35, %s36
      %p38 = scmp.eq.s32.totalorder %s37, 0
      %s40 = sadd.s32 %s39, 1
      %s41 = scalar_select %p38, %s39, %s40
      %p44 = pneg %p38
      %p45 = scmp.eq.s32.totalorder %s15, 1
      %p46 = por %p44, %p45
      %p47 = scmp.ne.s32.totalorder %s39, %s42
      %p48 = scmp.eq.s32.totalorder %s15, 0
      %p49 = por %p47, %p48
      %p50 = scmp.ne.s32.totalorder %s39, %s42
      %p51 = scmp.eq.s32.totalorder %s20, 1
      %p52 = por %p50, %p51
      %p53 = scmp.ne.s32.totalorder %s42, %s43
      %p54 = scmp.eq.s32.totalorder %s20, 0
      %p55 = por %p53, %p54
      %p56 = scmp.ne.s32.totalorder %s42, %s43
      %p57 = scmp.eq.s32.totalorder %s21, 1
      %p58 = por %p56, %p57
      %p60 = scmp.ne.s32.totalorder %s43, %s59
      %p61 = scmp.eq.s32.totalorder %s21, 0
      %p62 = por %p60, %p61
      %s64 = sadd.s32 %s63, 1
      %p67 = scmp.eq.s32.totalorder %s15, 1
      %p68 = scmp.ne.s32.totalorder %s63, %s65
      %p69 = scmp.eq.s32.totalorder %s15, 0
      %p70 = por %p68, %p69
      %p71 = scmp.ne.s32.totalorder %s63, %s65
      %p72 = scmp.eq.s32.totalorder %s20, 1
      %p73 = por %p71, %p72
      %p74 = scmp.ne.s32.totalorder %s65, %s66
      %p75 = scmp.eq.s32.totalorder %s20, 0
      %p76 = por %p74, %p75
      %p77 = scmp.ne.s32.totalorder %s65, %s66
      %p78 = scmp.eq.s32.totalorder %s21, 1
      %p79 = por %p77, %p78
      %p81 = scmp.ne.s32.totalorder %s66, %s80
      %p82 = scmp.eq.s32.totalorder %s21, 0
      %p83 = por %p81, %p82
      %s84 = ssub.s32 %s22, %s34
      %s85 = ssub.s32 %s23, %s30
      %s86 = sor.u32 %s84, %s85
      %p87 = scmp.eq.s32.totalorder %s86, 0
      %s89 = sadd.s32 %s88, 1
      %s90 = scalar_select %p87, %s88, %s89
      %p93 = pneg %p87
      %p94 = scmp.eq.s32.totalorder %s15, 1
      %p95 = por %p93, %p94
      %p96 = scmp.ne.s32.totalorder %s88, %s91
      %p97 = scmp.eq.s32.totalorder %s15, 0
      %p98 = por %p96, %p97
      %p99 = scmp.ne.s32.totalorder %s88, %s91
      %p100 = scmp.eq.s32.totalorder %s20, 1
      %p101 = por %p99, %p100
      %p102 = scmp.ne.s32.totalorder %s91, %s92
      %p103 = scmp.eq.s32.totalorder %s20, 0
      %p104 = por %p102, %p103
      %p105 = scmp.ne.s32.totalorder %s91, %s92
      %p106 = scmp.eq.s32.totalorder %s21, 1
      %p107 = por %p105, %p106
      %p109 = scmp.ne.s32.totalorder %s92, %s108
      %p110 = scmp.eq.s32.totalorder %s21, 0
      %p111 = por %p109, %p110
      %s112 = ssub.s32 %s22, %s34
      %s113 = ssub.s32 %s23, %s30
      %s114 = sor.u32 %s112, %s113
      %p115 = scmp.eq.s32.totalorder %s114, 0
      %s117 = sadd.s32 %s116, 1
      %s118 = scalar_select %p115, %s116, %s117
      %p121 = pneg %p115
      %p122 = scmp.eq.s32.totalorder %s15, 1
      %p123 = por %p121, %p122
      %p124 = scmp.ne.s32.totalorder %s116, %s119
      %p125 = scmp.eq.s32.totalorder %s15, 0
      %p126 = por %p124, %p125
      %p127 = scmp.ne.s32.totalorder %s116, %s119
      %p128 = scmp.eq.s32.totalorder %s20, 1
      %p129 = por %p127, %p128
      %p130 = scmp.ne.s32.totalorder %s119, %s120
      %p131 = scmp.eq.s32.totalorder %s20, 0
      %p132 = por %p130, %p131
      %p133 = scmp.ne.s32.totalorder %s119, %s120
      %p134 = scmp.eq.s32.totalorder %s21, 1
      %p135 = por %p133, %p134
      %p137 = scmp.ne.s32.totalorder %s120, %s136
      %p138 = scmp.eq.s32.totalorder %s21, 0
      %p139 = por %p137, %p138
      %s140 = ssub.s32 %s22, %s34
      %s141 = ssub.s32 %s23, %s30
      %s142 = sor.u32 %s140, %s141
      %p143 = scmp.eq.s32.totalorder %s142, 0
      %s145 = sadd.s32 %s144, 1
      %s146 = scalar_select %p143, %s144, %s145
      %p149 = pneg %p143
      %p150 = scmp.eq.s32.totalorder %s15, 1
      %p151 = por %p149, %p150
      %p152 = scmp.ne.s32.totalorder %s144, %s147
      %p153 = scmp.eq.s32.totalorder %s15, 0
      %p154 = por %p152, %p153
      %p155 = scmp.ne.s32.totalorder %s144, %s147
      %p156 = scmp.eq.s32.totalorder %s20, 1
      %p157 = por %p155, %p156
      %p158 = scmp.ne.s32.totalorder %s147, %s148
      %p159 = scmp.eq.s32.totalorder %s20, 0
      %p160 = por %p158, %p159
      %p161 = scmp.ne.s32.totalorder %s147, %s148
      %p162 = scmp.eq.s32.totalorder %s21, 1
      %p163 = por %p161, %p162
      %p165 = scmp.ne.s32.totalorder %s148, %s164
      %p166 = scmp.eq.s32.totalorder %s21, 0
      %p167 = por %p165, %p166
      %p168 = scmp.le.s32.totalorder 1, %s15
      %p169 = scmp.lt.s32.totalorder %s15, 3
      %p170 = pnand %p168, %p169
      %p171 = pneg %p170
      // Predicated region
      $region9: #{tpu_custom_call.1} parent=5 // pred_check
        _
      $region10: #{tpu_custom_call.1} parent=5 // pred_check_branch
        %173 = sbr.rel (%p170) target = $region12
      $region11: #{tpu_custom_call.1} parent=5 // pred_region
        %s174 = ssub.s32 %s15, 1
        // Predicated region
        $region13: #{tpu_custom_call.1} parent=11 // pred_check
          %p175 = pneg %p76
        $region14: #{tpu_custom_call.1} parent=11 // pred_check_branch
          %177 = sbr.rel (%p175) target = $region16
        $region15: #{tpu_custom_call.1} parent=11 // pred_region
          %179 = vsyncadd [#allocation5], 0
          %s180 = sshll.u32 %s1, 4
          %s181 = int_to_ptr.hbm [resolvable:$true] %s180
          %s182 = sshll.u32 [#allocation4], 4
          %s183 = int_to_ptr.vmem [resolvable:$true] %s182
          %188 = dma.hbm_to_vmem [thread:$0]  %s181, 512, %s183, [#allocation5], 128, 128, 8
        $region16: #{tpu_custom_call.1} parent=11 // pred_fallthru
          _
      $region12: #{tpu_custom_call.1} parent=5 // pred_fallthru
        _
      %p189 = scmp.lt.s32.totalorder %s15, 2
      // Predicated region
      $region17: #{tpu_custom_call.1} parent=5 // pred_check
        %p190 = pneg %p189
      $region18: #{tpu_custom_call.1} parent=5 // pred_check_branch
        %192 = sbr.rel (%p190) target = $region20
      $region19: #{tpu_custom_call.1} parent=5 // pred_region
        // Predicated region
        $region21: #{tpu_custom_call.1} parent=19 // pred_check
          %p193 = pneg %p49
        $region22: #{tpu_custom_call.1} parent=19 // pred_check_branch
          %195 = sbr.rel (%p193) target = $region24
        $region23: #{tpu_custom_call.1} parent=19 // pred_region
          %s196 = sand.u32 %s39, 1
          %s197 = scalar_lea.sflag [#allocation3], %s196
          %s198 = sand.u32 %s39, 1
          %s199 = smul.addr %s198, 16
          %s200 = scalar_lea.vmem [#allocation2], %s199
          %s201 = smul.u32 2, %s23
          %203 = vsyncadd %s197, 0
          %s204 = smul.addr %s22, 2
          %s205 = sadd.s32 %s201, %s204
          %s206 = smul.addr %s205, 8
          %s207 = scalar_lea.hbm %s0, %s206
          %s208 = sshll.u32 %s207, 4
          %s209 = int_to_ptr.hbm [resolvable:$true] %s208
          %s210 = sshll.u32 %s200, 4
          %s211 = int_to_ptr.vmem [resolvable:$true] %s210
          %216 = dma.hbm_to_vmem [thread:$0]  %s209, 256, %s211, %s197, 128, 128, 8
        $region24: #{tpu_custom_call.1} parent=19 // pred_fallthru
          _
      $region20: #{tpu_custom_call.1} parent=5 // pred_fallthru
        _
      %p217 = scmp.le.s32.totalorder 1, %s15
      %p218 = scmp.lt.s32.totalorder %s15, 3
      %p219 = pnand %p217, %p218
      %p220 = pneg %p219
      // Predicated region
      $region25: #{tpu_custom_call.1} parent=5 // pred_check
        _
      $region26: #{tpu_custom_call.1} parent=5 // pred_check_branch
        %222 = sbr.rel (%p219) target = $region28
      $region27: #{tpu_custom_call.1} parent=5 // pred_region
        %s223 = ssub.s32 %s15, 1
        %s224 = sand.u32 %s42, 1
        %s225 = scalar_lea.sflag [#allocation3], %s224
        %s226 = sand.u32 %s42, 1
        %s227 = smul.addr %s226, 16
        %s228 = scalar_lea.vmem [#allocation2], %s227
        // Predicated region
        $region29: #{tpu_custom_call.1} parent=27 // pred_check
          %p229 = pneg %p55
        $region30: #{tpu_custom_call.1} parent=27 // pred_check_branch
          %231 = sbr.rel (%p229) target = $region32
        $region31: #{tpu_custom_call.1} parent=27 // pred_region
          %233 = dma.done %s225, 256
        $region32: #{tpu_custom_call.1} parent=27 // pred_fallthru
          _
        // Predicated region
        $region33: #{tpu_custom_call.1} parent=27 // pred_check
          %p234 = pneg %p76
        $region34: #{tpu_custom_call.1} parent=27 // pred_check_branch
          %236 = sbr.rel (%p234) target = $region36
        $region35: #{tpu_custom_call.1} parent=27 // pred_region
          %238 = dma.done [#allocation5], 512
        $region36: #{tpu_custom_call.1} parent=27 // pred_fallthru
          _
        %s239 = sand.u32 %s42, 1
        %s240 = scalar_lea.sflag [#allocation3], %s239
        %s241 = sand.u32 %s42, 1
        %s242 = smul.addr %s241, 16
        %s243 = scalar_lea.vmem [#allocation2], %s242
        %p244 = pneg %p55
        %p245 = pneg %p52
        %p246 = pneg %p76
        %p247 = pneg %p73
        %p248 = pneg %p104
        %p249 = pneg %p101
        %s250 = smul.u32 2, %s25
        %p251 = scmp.lt.s32.totalorder %s24, 1
        %s252 = scalar_select %p251, %s24, 1
        %p253 = scmp.lt.s32.totalorder %s250, 1
        %s254 = scalar_select %p253, %s250, 1
        %s255 = smul.addr %s252, 8
        %s256 = sadd.s32 %s254, %s255
        %s257 = smul.addr %s256, 8
        %s258 = scalar_lea.vmem %s2, %s257
        %p259 = pneg %p132
        %p260 = pneg %p129
        %s261 = smul.u32 2, %s25
        %p262 = scmp.lt.s32.totalorder %s24, 1
        %s263 = scalar_select %p262, %s24, 1
        %p264 = scmp.lt.s32.totalorder %s261, 1
        %s265 = scalar_select %p264, %s261, 1
        %s266 = smul.addr %s263, 8
        %s267 = sadd.s32 %s265, %s266
        %s268 = smul.addr %s267, 8
        %s269 = scalar_lea.vmem %s3, %s268
        %p270 = pneg %p160
        %p271 = pneg %p157
        %s272 = smul.u32 2, %s25
        %p273 = scmp.lt.s32.totalorder %s24, 1
        %s274 = scalar_select %p273, %s24, 1
        %p275 = scmp.lt.s32.totalorder %s272, 1
        %s276 = scalar_select %p275, %s272, 1
        %s277 = smul.addr %s274, 8
        %s278 = sadd.s32 %s276, %s277
        %s279 = smul.addr %s278, 8
        %s280 = scalar_lea.vmem %s4, %s279
        %s281 = smul.u32 2, %s25
        %s282 = smul.u32 2, %s25
        %p283 = scmp.lt.s32.totalorder %s24, 1
        %s284 = scalar_select %p283, %s24, 1
        %p285 = scmp.lt.s32.totalorder %s282, 1
        %s286 = scalar_select %p285, %s282, 1
        %s287 = smul.addr %s284, 8
        %s288 = sadd.s32 %s286, %s287
        %s289 = smul.addr %s288, 8
        %s290 = scalar_lea.vmem %s2, %s289
        %s291 = smul.u32 2, %s25
        %s292 = smul.u32 2, %s25
        %p293 = scmp.lt.s32.totalorder %s24, 1
        %s294 = scalar_select %p293, %s24, 1
        %p295 = scmp.lt.s32.totalorder %s292, 1
        %s296 = scalar_select %p295, %s292, 1
        %s297 = smul.addr %s294, 8
        %s298 = sadd.s32 %s296, %s297
        %s299 = smul.addr %s298, 8
        %s300 = scalar_lea.vmem %s3, %s299
        %s301 = smul.u32 2, %s25
        %s302 = smul.u32 2, %s25
        %p303 = scmp.lt.s32.totalorder %s24, 1
        %s304 = scalar_select %p303, %s24, 1
        %p305 = scmp.lt.s32.totalorder %s302, 1
        %s306 = scalar_select %p305, %s302, 1
        %s307 = smul.addr %s304, 8
        %s308 = sadd.s32 %s306, %s307
        %s309 = smul.addr %s308, 8
        %s310 = scalar_lea.vmem %s4, %s309
        %s311 = smul.u32 2, %s25
        %v312 = vld [vmem:[%s228] sm:$0xff]
        %v313 = vld [vmem:[%s228 + $0x8] sm:$0xff]
        %v314 = vld [vmem:[#allocation4] sm:$0xff]
        %v315 = vld [vmem:[#allocation4 + $0x8] sm:$0xff]
        %v316 = vld [vmem:[#allocation4 + $0x10] sm:$0xff]
        %v317 = vld [vmem:[#allocation4 + $0x18] sm:$0xff]
        %vm318 = vcmask 261120
        %v320 = vsel %vm318, %v312, 0
        %v323 = vsel %vm318, %v313, 0
        %325 = vmatpush.msra.mxu0 0.0
        %326 = vmatpush.msra.mxu0 0.0
        %327 = vmatpush.msra.mxu0 0.0
        %328 = vmatpush.msra.mxu0 0.0
        %329 = vmatpush.msra.mxu0 0.0
        %330 = vmatpush.msra.mxu0 0.0
        %331 = vmatpush.msra.mxu0 0.0
        %332 = vmatpush.msra.mxu0 0.0
        %333 = vmatpush.msra.mxu0 0.0
        %334 = vmatpush.msra.mxu0 0.0
        %335 = vmatpush.msra.mxu0 0.0
        %336 = vmatpush.msra.mxu0 0.0
        %337 = vmatpush.msra.mxu0 %v317
        %338 = vmatpush.msra.mxu0 %v316
        %339 = vmatpush.msra.mxu0 %v315
        %340 = vmatpush.msra.mxu0 %v314
        %341 = vmatmul.f32.gmra.mxu0 %v320
        %v342 = vpop.f32.mrf.mxu0
        %v343 = vadd.f32 0.0, %v342
        %344 = vmatmul.f32.gmra.mxu0 %v323
        %v345 = vpop.f32.mrf.mxu0
        %v346 = vadd.f32 0.0, %v345
        %347 = vdwg.mxu0
        %vm348 = vcmask 64512
        %349 = vst.msk [vmem:[%s290] sm:$0xff] %vm348, %v343
        %350 = vst.msk [vmem:[%s290 + $0x8] sm:$0xff] %vm348, %v346
        %353 = vrot.lane.b32.xlu0 %v343, 96
        %v354 = vpop.permute.xlu0 %353
        %355 = vrot.lane.b32.xlu0 %v346, 96
        %v356 = vpop.permute.xlu0 %355
        %359 = vst.msk [vmem:[%s300] sm:$0xff] %vm348, %v354
        %360 = vst.msk [vmem:[%s300 + $0x8] sm:$0xff] %vm348, %v356
        %361 = vrot.lane.b32.xlu0 %v343, 64
        %v362 = vpop.permute.xlu0 %361
        %363 = vrot.lane.b32.xlu0 %v346, 64
        %v364 = vpop.permute.xlu0 %363
        %367 = vst.msk [vmem:[%s310] sm:$0xff] %vm348, %v362
        %368 = vst.msk [vmem:[%s310 + $0x8] sm:$0xff] %vm348, %v364
        %369 = vrot.lane.b32.xlu0 %v343, 120
        %v370 = vpop.permute.xlu0 %369
        %371 = vrot.lane.b32.xlu0 %v346, 120
        %v372 = vpop.permute.xlu0 %371
        %s375 = scalar_lea.vmem %s290, 16
        %376 = vst.msk [vmem:[%s375] sm:$0xff] %vm348, %v370
        %377 = vst.msk [vmem:[%s375 + $0x8] sm:$0xff] %vm348, %v372
        %378 = vrot.lane.b32.xlu0 %v343, 88
        %v379 = vpop.permute.xlu0 %378
        %380 = vrot.lane.b32.xlu0 %v346, 88
        %v381 = vpop.permute.xlu0 %380
        %s384 = scalar_lea.vmem %s300, 16
        %385 = vst.msk [vmem:[%s384] sm:$0xff] %vm348, %v379
        %386 = vst.msk [vmem:[%s384 + $0x8] sm:$0xff] %vm348, %v381
        %387 = vrot.lane.b32.xlu0 %v343, 56
        %v388 = vpop.permute.xlu0 %387
        %389 = vrot.lane.b32.xlu0 %v346, 56
        %v390 = vpop.permute.xlu0 %389
        %s393 = scalar_lea.vmem %s310, 16
        %394 = vst.msk [vmem:[%s393] sm:$0xff] %vm348, %v388
        %395 = vst.msk [vmem:[%s393 + $0x8] sm:$0xff] %vm348, %v390
        %396 = vrot.lane.b32.xlu0 %v343, 112
        %v397 = vpop.permute.xlu0 %396
        %398 = vrot.lane.b32.xlu0 %v346, 112
        %v399 = vpop.permute.xlu0 %398
        %s402 = scalar_lea.vmem %s290, 32
        %403 = vst.msk [vmem:[%s402] sm:$0xff] %vm348, %v397
        %404 = vst.msk [vmem:[%s402 + $0x8] sm:$0xff] %vm348, %v399
        %405 = vrot.lane.b32.xlu0 %v343, 80
        %v406 = vpop.permute.xlu0 %405
        %407 = vrot.lane.b32.xlu0 %v346, 80
        %v408 = vpop.permute.xlu0 %407
        %s411 = scalar_lea.vmem %s300, 32
        %412 = vst.msk [vmem:[%s411] sm:$0xff] %vm348, %v406
        %413 = vst.msk [vmem:[%s411 + $0x8] sm:$0xff] %vm348, %v408
        %414 = vrot.lane.b32.xlu0 %v343, 48
        %v415 = vpop.permute.xlu0 %414
        %416 = vrot.lane.b32.xlu0 %v346, 48
        %v417 = vpop.permute.xlu0 %416
        %s420 = scalar_lea.vmem %s310, 32
        %421 = vst.msk [vmem:[%s420] sm:$0xff] %vm348, %v415
        %422 = vst.msk [vmem:[%s420 + $0x8] sm:$0xff] %vm348, %v417
        %423 = vrot.lane.b32.xlu0 %v343, 104
        %v424 = vpop.permute.xlu0 %423
        %425 = vrot.lane.b32.xlu0 %v346, 104
        %v426 = vpop.permute.xlu0 %425
        %s429 = scalar_lea.vmem %s290, 48
        %430 = vst.msk [vmem:[%s429] sm:$0xff] %vm348, %v424
        %431 = vst.msk [vmem:[%s429 + $0x8] sm:$0xff] %vm348, %v426
        %432 = vrot.lane.b32.xlu0 %v343, 72
        %v433 = vpop.permute.xlu0 %432
        %434 = vrot.lane.b32.xlu0 %v346, 72
        %v435 = vpop.permute.xlu0 %434
        %s438 = scalar_lea.vmem %s300, 48
        %439 = vst.msk [vmem:[%s438] sm:$0xff] %vm348, %v433
        %440 = vst.msk [vmem:[%s438 + $0x8] sm:$0xff] %vm348, %v435
        %441 = vrot.lane.b32.xlu0 %v343, 40
        %v442 = vpop.permute.xlu0 %441
        %443 = vrot.lane.b32.xlu0 %v346, 40
        %v444 = vpop.permute.xlu0 %443
        %s447 = scalar_lea.vmem %s310, 48
        %448 = vst.msk [vmem:[%s447] sm:$0xff] %vm348, %v442
        %449 = vst.msk [vmem:[%s447 + $0x8] sm:$0xff] %vm348, %v444
        %s450 = smul.u32 2, %s25
        %p451 = scmp.lt.s32.totalorder %s24, 1
        %s452 = scalar_select %p451, %s24, 1
        %p453 = scmp.lt.s32.totalorder %s450, 1
        %s454 = scalar_select %p453, %s450, 1
        %s455 = smul.addr %s452, 8
        %s456 = sadd.s32 %s454, %s455
        %s457 = smul.addr %s456, 8
        %s458 = scalar_lea.vmem %s2, %s457
        %s459 = smul.u32 2, %s25
        %p460 = scmp.lt.s32.totalorder %s24, 1
        %s461 = scalar_select %p460, %s24, 1
        %p462 = scmp.lt.s32.totalorder %s459, 1
        %s463 = scalar_select %p462, %s459, 1
        %s464 = smul.addr %s461, 8
        %s465 = sadd.s32 %s463, %s464
        %s466 = smul.addr %s465, 8
        %s467 = scalar_lea.vmem %s3, %s466
        %s468 = smul.u32 2, %s25
        %p469 = scmp.lt.s32.totalorder %s24, 1
        %s470 = scalar_select %p469, %s24, 1
        %p471 = scmp.lt.s32.totalorder %s468, 1
        %s472 = scalar_select %p471, %s468, 1
        %s473 = smul.addr %s470, 8
        %s474 = sadd.s32 %s472, %s473
        %s475 = smul.addr %s474, 8
        %s476 = scalar_lea.vmem %s4, %s475
        // Predicated region
        $region37: #{tpu_custom_call.1} parent=27 // pred_check
          %p477 = pneg %p101
        $region38: #{tpu_custom_call.1} parent=27 // pred_check_branch
          %479 = sbr.rel (%p477) target = $region40
        $region39: #{tpu_custom_call.1} parent=27 // pred_region
          %s480 = smul.u32 2, %s25
        $region40: #{tpu_custom_call.1} parent=27 // pred_fallthru
          _
        // Predicated region
        $region41: #{tpu_custom_call.1} parent=27 // pred_check
          %p481 = pneg %p129
        $region42: #{tpu_custom_call.1} parent=27 // pred_check_branch
          %483 = sbr.rel (%p481) target = $region44
        $region43: #{tpu_custom_call.1} parent=27 // pred_region
          %s484 = smul.u32 2, %s25
        $region44: #{tpu_custom_call.1} parent=27 // pred_fallthru
          _
        // Predicated region
        $region45: #{tpu_custom_call.1} parent=27 // pred_check
          %p485 = pneg %p157
        $region46: #{tpu_custom_call.1} parent=27 // pred_check_branch
          %487 = sbr.rel (%p485) target = $region48
        $region47: #{tpu_custom_call.1} parent=27 // pred_region
          %s488 = smul.u32 2, %s25
        $region48: #{tpu_custom_call.1} parent=27 // pred_fallthru
          _
      $region28: #{tpu_custom_call.1} parent=5 // pred_fallthru
        _
      %p489 = scmp.le.s32.totalorder 2, %s15
      // Predicated region
      $region49: #{tpu_custom_call.1} parent=5 // pred_check
        %p490 = pneg %p489
      $region50: #{tpu_custom_call.1} parent=5 // pred_check_branch
        %492 = sbr.rel (%p490) target = $region52
      $region51: #{tpu_custom_call.1} parent=5 // pred_region
        %s493 = ssub.s32 %s15, 2
        // Predicated region
        $region53: #{tpu_custom_call.1} parent=51 // pred_check
          %p494 = pneg %p107
        $region54: #{tpu_custom_call.1} parent=51 // pred_check_branch
          %496 = sbr.rel (%p494) target = $region56
        $region55: #{tpu_custom_call.1} parent=51 // pred_region
          %s497 = smul.u32 2, %s27
          %p498 = scmp.lt.s32.totalorder %s26, 1
          %s499 = scalar_select %p498, %s26, 1
          %p500 = scmp.lt.s32.totalorder %s497, 1
          %s501 = scalar_select %p500, %s497, 1
          %s502 = smul.addr %s499, 8
          %s503 = sadd.s32 %s501, %s502
          %s504 = smul.addr %s503, 8
          %s505 = scalar_lea.vmem %s2, %s504
        $region56: #{tpu_custom_call.1} parent=51 // pred_fallthru
          _
        // Predicated region
        $region57: #{tpu_custom_call.1} parent=51 // pred_check
          %p506 = pneg %p135
        $region58: #{tpu_custom_call.1} parent=51 // pred_check_branch
          %508 = sbr.rel (%p506) target = $region60
        $region59: #{tpu_custom_call.1} parent=51 // pred_region
          %s509 = smul.u32 2, %s27
          %p510 = scmp.lt.s32.totalorder %s26, 1
          %s511 = scalar_select %p510, %s26, 1
          %p512 = scmp.lt.s32.totalorder %s509, 1
          %s513 = scalar_select %p512, %s509, 1
          %s514 = smul.addr %s511, 8
          %s515 = sadd.s32 %s513, %s514
          %s516 = smul.addr %s515, 8
          %s517 = scalar_lea.vmem %s3, %s516
        $region60: #{tpu_custom_call.1} parent=51 // pred_fallthru
          _
        // Predicated region
        $region61: #{tpu_custom_call.1} parent=51 // pred_check
          %p518 = pneg %p163
        $region62: #{tpu_custom_call.1} parent=51 // pred_check_branch
          %520 = sbr.rel (%p518) target = $region64
        $region63: #{tpu_custom_call.1} parent=51 // pred_region
          %s521 = smul.u32 2, %s27
          %p522 = scmp.lt.s32.totalorder %s26, 1
          %s523 = scalar_select %p522, %s26, 1
          %p524 = scmp.lt.s32.totalorder %s521, 1
          %s525 = scalar_select %p524, %s521, 1
          %s526 = smul.addr %s523, 8
          %s527 = sadd.s32 %s525, %s526
          %s528 = smul.addr %s527, 8
          %s529 = scalar_lea.vmem %s4, %s528
        $region64: #{tpu_custom_call.1} parent=51 // pred_fallthru
          _
      $region52: #{tpu_custom_call.1} parent=5 // pred_fallthru
        _
    $region6: #{tpu_custom_call.1} parent=1 // loop_footer
      %s19 = sadd.s32 1, %s15
    $region7: #{tpu_custom_call.1} parent=1 // loop_footer_branch
      %14 = sbr.rel target = $region3
    $region8: #{tpu_custom_call.1} parent=1 // loop_exit
      _
    %530 = vsyncpa [#allocation3], 1
    %s531 = scalar_lea.sflag [#allocation3], 1
    %532 = vsyncpa %s531, 1
    %533 = vsyncpa [#allocation5], 1

</llo_original>
